<compile_context>
chip_gen: v6e
topology: v6e:2x2x1
jax: 0.10.0
libtpu: 0.0.40
codegen_flags: <defaults>
</compile_context>

<pallas_src>
import jax
import jax.numpy as jnp
from jax.experimental import pallas as pl
from jax.experimental.pallas import tpu as pltpu

BN_EPS = 1e-5
_MAX_TILE_B = 512  # amortizes ~0.35us/step overhead; double-buffered x tiles +
                   # resident bf16 weights stay under the v5e 16 MiB scoped default
                   # even at the real D=2048 embedding width.


def _pick_tile_b(batch):
    """Batch rows per grid step.

    * batch <= 128: one full-array block (always layout-legal, no edge padding).
    * otherwise: a multiple of 128, capped at _MAX_TILE_B and at ~batch/2 so the
      1-D 'parallel' grid has >= 2 tiles to shard across the two v7x TensorCores.
    """
    if batch <= 128:
        return batch
    t = (batch // 2) // 128 * 128
    return max(128, min(_MAX_TILE_B, t))


def _mlp_head_kernel(x_ref, w1_ref, b1_ref, w2_ref, b2_ref, w3_ref, b3_ref, o_ref):
    """(Linear+BN folded)->ReLU (x2) -> Linear(.,1) -> sigmoid for one batch tile.

    The output tile is a lane-dense (1, TILE_B) row: the final 256->1 projection is
    computed as (1, H2) @ (H2, TILE_B) so the batch lands on the lane axis and the
    store is unmasked, instead of a 1-lane column of masked partial stores.
    """
    # ----- block 1: Linear(input_dim, 512) [BN + bias folded into w1/b1] + ReLU -----
    x = x_ref[...].astype(jnp.bfloat16)            # no-op if x is already bf16
    h1 = jnp.dot(x, w1_ref[...], preferred_element_type=jnp.float32) + b1_ref[...]
    h1 = jnp.maximum(h1, 0.0)                      # ReLU (Dropout == identity in eval)

    # ----- block 2: Linear(512, 256) [BN + bias folded into w2/b2] + ReLU -----
    h2 = jnp.dot(h1.astype(jnp.bfloat16), w2_ref[...],
                 preferred_element_type=jnp.float32) + b2_ref[...]
    h2 = jnp.maximum(h2, 0.0)

    # ----- final: Linear(256, 1) + sigmoid, batch on the LANE axis -----
    # One XLU transpose of the activation tile (XLU slot is otherwise idle here)
    # buys a lane-dense output; sigmoid via EUP exp + approximate reciprocal.
    h2_t = h2.T.astype(jnp.bfloat16)               # (H2, TILE_B)
    logits = jnp.dot(w3_ref[...], h2_t,
                     preferred_element_type=jnp.float32) + b3_ref[0, 0]
    o_ref[...] = pl.reciprocal(1.0 + jnp.exp(-logits), approx=True)


@jax.jit
def inception_v3_binary_classifier_forward(x, params):
    """x: [B, input_dim] float32 or bfloat16.  Returns sigmoid probabilities [B, 1] f32."""
    w1, b1, w2, b2, w3, b3 = params
    B, D = x.shape
    H1 = w1.shape[1]
    H2 = w2.shape[1]

    tile_b = _pick_tile_b(B)
    num_tiles = pl.cdiv(B, tile_b)   # ragged edge handled as a partial block (no jnp.pad)

    cost = pl.CostEstimate(
        flops=2 * B * (D * H1 + H1 * H2 + H2),
        transcendentals=2 * B,                          # exp + reciprocal per row
        bytes_accessed=(B * D * x.dtype.itemsize        # x stream
                        + (D * H1 + H1 * H2 + H2) * 2   # resident bf16 weights
                        + (H1 + H2 + 1) * 4             # folded biases
                        + num_tiles * tile_b * 4),      # lane-dense output
    )

    out = pl.pallas_call(
        _mlp_head_kernel,
        out_shape=jax.ShapeDtypeStruct((num_tiles, tile_b), jnp.float32),
        grid=(num_tiles,),
        in_specs=[
            pl.BlockSpec((tile_b, D), lambda i: (i, 0)),   # x: streamed / double-buffered
            pl.BlockSpec((D, H1), lambda i: (0, 0)),       # w1: resident (bf16, BN folded)
            pl.BlockSpec((1, H1), lambda i: (0, 0)),       # b1 (bias + BN shift folded)
            pl.BlockSpec((H1, H2), lambda i: (0, 0)),      # w2: resident (bf16, BN folded)
            pl.BlockSpec((1, H2), lambda i: (0, 0)),       # b2
            pl.BlockSpec((1, H2), lambda i: (0, 0)),       # w3 row (bf16)
            pl.BlockSpec(memory_space=pltpu.MemorySpace.SMEM),  # b3: scalar in SMEM
        ],
        out_specs=pl.BlockSpec((1, tile_b), lambda i: (i, 0)),  # lane-dense rows
        compiler_params=pltpu.CompilerParams(
            dimension_semantics=("parallel",),          # shard batch tiles across v7x TCs
            vmem_limit_bytes=32 * 1024 * 1024),
        cost_estimate=cost,
    )(x, w1, b1, w2, b2, w3, b3)

    # (num_tiles, tile_b) row-major == padded batch order; drop any edge padding rows.
    return out.reshape(num_tiles * tile_b)[:B].reshape(B, 1)


def make_params(key, input_dim, hidden_dims=(512, 256)):
    """Deterministic synthetic parameters matching the nn.Module shapes.

    Linear weights are created in PyTorch's [out, in] convention, transposed to
    [in, out], and the BatchNorm1d running-stat affine (scale, shift) plus the
    Linear bias are folded into (W', b') as a one-time static transform.
    w1/w2/w3 are stored in bfloat16; biases stay f32 (b3 lives in SMEM).
    """
    keys = jax.random.split(key, 16)
    ki = iter(range(16))

    def linear(in_dim, out_dim):
        lim = 1.0 / jnp.sqrt(jnp.float32(in_dim))
        w = jax.random.uniform(keys[next(ki)], (out_dim, in_dim),
                               jnp.float32, -lim, lim)       # PyTorch [out, in]
        b = jax.random.uniform(keys[next(ki)], (out_dim,),
                               jnp.float32, -lim, lim)
        return w.T, b                                        # [in, out], [out]

    def batchnorm(dim):
        gamma = 1.0 + 0.1 * jax.random.normal(keys[next(ki)], (dim,), jnp.float32)
        beta = 0.1 * jax.random.normal(keys[next(ki)], (dim,), jnp.float32)
        running_mean = 0.05 * jax.random.normal(keys[next(ki)], (dim,), jnp.float32)
        running_var = 1.0 + 0.1 * jax.random.uniform(keys[next(ki)], (dim,), jnp.float32)
        scale = gamma / jnp.sqrt(running_var + BN_EPS)
        shift = beta - running_mean * scale
        return scale, shift

    h1, h2 = hidden_dims
    w1, b1 = linear(input_dim, h1)
    s1, t1 = batchnorm(h1)
    w2, b2 = linear(h1, h2)
    s2, t2 = batchnorm(h2)
    w3, b3 = linear(h2, 1)                                   # w3: [256, 1], b3: [1]

    # Fold bias + BatchNorm into the weights (zero per-call cost).
    w1f = (w1 * s1[None, :]).astype(jnp.bfloat16)
    b1f = (b1 * s1 + t1).reshape(1, h1)
    w2f = (w2 * s2[None, :]).astype(jnp.bfloat16)
    b2f = (b2 * s2 + t2).reshape(1, h2)
    w3f = w3.T.astype(jnp.bfloat16)                          # [1, 256] bf16
    b3f = b3.reshape(1, 1)
    return (w1f, b1f, w2f, b2f, w3f, b3f)


def reference_forward(x, params):
    """Plain-JAX reference using the same stored (folded, bf16) parameters."""
    w1, b1, w2, b2, w3, b3 = params
    xb = x.astype(jnp.bfloat16)
    h1 = jnp.maximum(
        jnp.dot(xb, w1, preferred_element_type=jnp.float32) + b1, 0.0)
    h2 = jnp.maximum(
        jnp.dot(h1.astype(jnp.bfloat16), w2, preferred_element_type=jnp.float32) + b2, 0.0)
    logits = jnp.dot(h2.astype(jnp.bfloat16), w3.T,
                     preferred_element_type=jnp.float32) + b3
    return jax.nn.sigmoid(logits)


if __name__ == "__main__":
    key = jax.random.PRNGKey(0)
    k_x, k_x2, k_p = jax.random.split(key, 3)

    INPUT_DIM = 64   # small stand-in for the 2048-d inception embedding

    params = make_params(k_p, INPUT_DIM)

    # Case 1: tiny batch streamed in bf16 (single full-array block).
    B1 = 8
    x1 = jax.random.normal(k_x, (B1, INPUT_DIM), jnp.float32).astype(jnp.bfloat16)
    out1 = jax.block_until_ready(inception_v3_binary_classifier_forward(x1, params))
    ref1 = reference_forward(x1, params)
    assert out1.shape == (B1, 1), out1.shape
    assert jnp.allclose(out1, ref1, atol=2e-3, rtol=2e-3), "mismatch vs reference (B=8)"

    # Case 2: ragged multi-tile f32 batch (grid of 3, partial edge block, no pad op).
    B2 = 300
    x2 = jax.random.normal(k_x2, (B2, INPUT_DIM), jnp.float32)
    out2 = jax.block_until_ready(inception_v3_binary_classifier_forward(x2, params))
    ref2 = reference_forward(x2, params)
    assert out2.shape == (B2, 1), out2.shape
    assert jnp.allclose(out2, ref2, atol=2e-3, rtol=2e-3), "mismatch vs reference (B=300)"

    print("KERNEL_OK")
</pallas_src>

<mosaic_0001>
module attributes {stable_mosaic.version = 11 : i64} {
  func.func @_mlp_head_kernel(%arg0: i32, %arg1: memref<8x64xbf16, #tpu.memory_space<vmem>>, %arg2: memref<64x512xbf16, #tpu.memory_space<vmem>>, %arg3: memref<1x512xf32, #tpu.memory_space<vmem>>, %arg4: memref<512x256xbf16, #tpu.memory_space<vmem>>, %arg5: memref<1x256xf32, #tpu.memory_space<vmem>>, %arg6: memref<1x256xbf16, #tpu.memory_space<vmem>>, %arg7: memref<1x1xf32, #tpu.memory_space<smem>>, %arg8: memref<1x8xf32, #tpu.memory_space<vmem>>) attributes {dimension_semantics = [#tpu.dimension_semantics<parallel>], iteration_bounds = array<i64: 1>, scalar_prefetch = 0 : i64, scratch_operands = 0 : i64, tpu.core_type = #tpu.core_type<tc>, window_params = [{transform_indices = @transform_0, window_bounds = array<i64: 8, 64>}, {pipeline_mode = #tpu.pipeline_mode<synchronous>, transform_indices = @transform_1, window_bounds = array<i64: 64, 512>}, {pipeline_mode = #tpu.pipeline_mode<synchronous>, transform_indices = @transform_2, window_bounds = array<i64: 1, 512>}, {pipeline_mode = #tpu.pipeline_mode<synchronous>, transform_indices = @transform_3, window_bounds = array<i64: 512, 256>}, {pipeline_mode = #tpu.pipeline_mode<synchronous>, transform_indices = @transform_4, window_bounds = array<i64: 1, 256>}, {pipeline_mode = #tpu.pipeline_mode<synchronous>, transform_indices = @transform_5, window_bounds = array<i64: 1, 256>}, {transform_indices = @transform_6, window_bounds = array<i64: 1, 1>}, {transform_indices = @transform_7, window_bounds = array<i64: 1, 8>}]} {
    %c0 = arith.constant 0 : index
    %c0_0 = arith.constant 0 : index
    %0 = vector.load %arg1[%c0, %c0_0] : memref<8x64xbf16, #tpu.memory_space<vmem>>, vector<8x64xbf16>
    %c0_1 = arith.constant 0 : index
    %c0_2 = arith.constant 0 : index
    %1 = vector.load %arg2[%c0_1, %c0_2] : memref<64x512xbf16, #tpu.memory_space<vmem>>, vector<64x512xbf16>
    %cst = arith.constant dense<0.000000e+00> : vector<8x512xf32>
    %2 = tpu.matmul %0, %1, %cst {dimension_numbers = #tpu.dot_dimension_numbers<[1], [0], [0], [1], [0, 0, 1, 1], [], []>} : vector<8x64xbf16>, vector<64x512xbf16>, vector<8x512xf32> -> vector<8x512xf32>
    %c0_3 = arith.constant 0 : index
    %c0_4 = arith.constant 0 : index
    %3 = vector.load %arg3[%c0_3, %c0_4] : memref<1x512xf32, #tpu.memory_space<vmem>>, vector<1x512xf32>
    %4 = vector.broadcast %3 : vector<1x512xf32> to vector<8x512xf32>
    %5 = arith.addf %2, %4 : vector<8x512xf32>
    %cst_5 = arith.constant 0.000000e+00 : f32
    %6 = vector.broadcast %cst_5 : f32 to vector<8x512xf32>
    %7 = arith.maximumf %5, %6 : vector<8x512xf32>
    %8 = arith.truncf %7 : vector<8x512xf32> to vector<8x512xbf16>
    %c0_6 = arith.constant 0 : index
    %c0_7 = arith.constant 0 : index
    %9 = vector.load %arg4[%c0_6, %c0_7] : memref<512x256xbf16, #tpu.memory_space<vmem>>, vector<512x256xbf16>
    %cst_8 = arith.constant dense<0.000000e+00> : vector<8x256xf32>
    %10 = tpu.matmul %8, %9, %cst_8 {dimension_numbers = #tpu.dot_dimension_numbers<[1], [0], [0], [1], [0, 0, 1, 1], [], []>} : vector<8x512xbf16>, vector<512x256xbf16>, vector<8x256xf32> -> vector<8x256xf32>
    %c0_9 = arith.constant 0 : index
    %c0_10 = arith.constant 0 : index
    %11 = vector.load %arg5[%c0_9, %c0_10] : memref<1x256xf32, #tpu.memory_space<vmem>>, vector<1x256xf32>
    %12 = vector.broadcast %11 : vector<1x256xf32> to vector<8x256xf32>
    %13 = arith.addf %10, %12 : vector<8x256xf32>
    %cst_11 = arith.constant 0.000000e+00 : f32
    %14 = vector.broadcast %cst_11 : f32 to vector<8x256xf32>
    %15 = arith.maximumf %13, %14 : vector<8x256xf32>
    %16 = tpu.transpose %15, [1, 0] : vector<8x256xf32> -> vector<256x8xf32>
    %17 = arith.truncf %16 : vector<256x8xf32> to vector<256x8xbf16>
    %c0_12 = arith.constant 0 : index
    %c0_13 = arith.constant 0 : index
    %18 = vector.load %arg6[%c0_12, %c0_13] : memref<1x256xbf16, #tpu.memory_space<vmem>>, vector<1x256xbf16>
    %cst_14 = arith.constant dense<0.000000e+00> : vector<1x8xf32>
    %19 = tpu.matmul %18, %17, %cst_14 {dimension_numbers = #tpu.dot_dimension_numbers<[1], [0], [0], [1], [0, 0, 1, 1], [], []>} : vector<1x256xbf16>, vector<256x8xbf16>, vector<1x8xf32> -> vector<1x8xf32>
    %c0_15 = arith.constant 0 : index
    %c0_16 = arith.constant 0 : index
    %20 = memref.load %arg7[%c0_15, %c0_16] : memref<1x1xf32, #tpu.memory_space<smem>>
    %21 = vector.broadcast %20 : f32 to vector<1x8xf32>
    %22 = arith.addf %19, %21 : vector<1x8xf32>
    %cst_17 = arith.constant 0.000000e+00 : f32
    %23 = vector.broadcast %cst_17 : f32 to vector<1x8xf32>
    %24 = arith.subf %23, %22 : vector<1x8xf32>
    %25 = math.exp %24 : vector<1x8xf32>
    %cst_18 = arith.constant 1.000000e+00 : f32
    %26 = vector.broadcast %cst_18 : f32 to vector<1x8xf32>
    %27 = arith.addf %26, %25 : vector<1x8xf32>
    %28 = tpu.reciprocal %27 {approx = true} : vector<1x8xf32> -> vector<1x8xf32>
    %c0_19 = arith.constant 0 : index
    %c0_20 = arith.constant 0 : index
    %29 = vector.load %arg8[%c0_19, %c0_20] : memref<1x8xf32, #tpu.memory_space<vmem>>, vector<1x8xf32>
    tpu.vector_store %arg8[%c0_19, %c0_20], %28 {strides = array<i32>} : memref<1x8xf32, #tpu.memory_space<vmem>>, vector<1x8xf32>,
    return
  }
  func.func @transform_0(%arg0: i32) -> (i32, i32) {
    %c0_i32 = arith.constant 0 : i32
    %c0_i32_0 = arith.constant 0 : i32
    return %arg0, %c0_i32 : i32, i32
  }
  func.func @transform_1(%arg0: i32) -> (i32, i32) {
    %c0_i32 = arith.constant 0 : i32
    %c0_i32_0 = arith.constant 0 : i32
    %c0_i32_1 = arith.constant 0 : i32
    return %c0_i32, %c0_i32_0 : i32, i32
  }
  func.func @transform_2(%arg0: i32) -> (i32, i32) {
    %c0_i32 = arith.constant 0 : i32
    %c0_i32_0 = arith.constant 0 : i32
    %c0_i32_1 = arith.constant 0 : i32
    return %c0_i32, %c0_i32_0 : i32, i32
  }
  func.func @transform_3(%arg0: i32) -> (i32, i32) {
    %c0_i32 = arith.constant 0 : i32
    %c0_i32_0 = arith.constant 0 : i32
    %c0_i32_1 = arith.constant 0 : i32
    return %c0_i32, %c0_i32_0 : i32, i32
  }
  func.func @transform_4(%arg0: i32) -> (i32, i32) {
    %c0_i32 = arith.constant 0 : i32
    %c0_i32_0 = arith.constant 0 : i32
    %c0_i32_1 = arith.constant 0 : i32
    return %c0_i32, %c0_i32_0 : i32, i32
  }
  func.func @transform_5(%arg0: i32) -> (i32, i32) {
    %c0_i32 = arith.constant 0 : i32
    %c0_i32_0 = arith.constant 0 : i32
    %c0_i32_1 = arith.constant 0 : i32
    return %c0_i32, %c0_i32_0 : i32, i32
  }
  func.func @transform_6(%arg0: i32) -> (i32, i32) {
    %c0_i32 = arith.constant 0 : i32
    %c0_i32_0 = arith.constant 0 : i32
    %c0_i32_1 = arith.constant 0 : i32
    return %c0_i32, %c0_i32_0 : i32, i32
  }
  func.func @transform_7(%arg0: i32) -> (i32, i32) {
    %c0_i32 = arith.constant 0 : i32
    %c0_i32_0 = arith.constant 0 : i32
    return %arg0, %c0_i32 : i32, i32
  }
}

</mosaic_0001>

<llo_original>
// kernel: inception_v3_binary_classifier_forward.1
$region0: #{inception_v3_binary_classifier_forward.1}
  #allocation0 [shape = 'u32[]', space=smem, size = 0x4, offset = 0x4, fixed_abs, tag = 'smem constant byte address 0x4 - core index']
  #allocation1 [shape = 'u32[144,128]{1,0:T(1,128)}', space=vmem, size = 0x12000, scoped, tag = 'internal scratch']
  #allocation2 [shape = 'f32[1,1]{1,0:T(1,128)S(6)}', space=smem, size = 0x200, scoped, tag = 'scoped memory for inception_v3_binary_classifier_forward.1']
  %s0 = inlined_call_operand.hbm [shape: bf16[8,64], index: 0, kind: input, shape index: {}]
  %s1 = inlined_call_operand.hbm [shape: bf16[64,512], index: 1, kind: input, shape index: {}]
  %s2 = inlined_call_operand.vmem [shape: f32[1,512], index: 2, kind: input, shape index: {}]
  %s3 = inlined_call_operand.hbm [shape: bf16[512,256], index: 3, kind: input, shape index: {}]
  %s4 = inlined_call_operand.vmem [shape: f32[1,256], index: 4, kind: input, shape index: {}]
  %s5 = inlined_call_operand.vmem [shape: bf16[1,256], index: 5, kind: input, shape index: {}]
  %s6 = inlined_call_operand.<no memory space> [shape: f32[1,1], index: 6, kind: input, shape index: {}]
  %s7 = inlined_call_operand.hbm [shape: f32[1,8], index: 7, kind: output, shape index: {}]
  %s8 = sld [smem:[#allocation0]]
  $region50: #{inception_v3_binary_classifier_forward.1} parent=0
    _
  %s10 = ssub.s32 1, %s8
  %s11 = scalar_select 0, %s10, %s8
  %12 = sst [smem:[#allocation2]] %s6
  $region1: #{inception_v3_binary_classifier_forward.1} parent=0
    #allocation3 [shape = 'u8[2048]{0}', space=vmem, size = 0x800, scoped, tag = 'input window, operand 0, single buffered']
    #allocation4 [shape = 's32[1]{0}', space=sflag, size = 0x4, scoped, tag = 'scoped memory for inception_v3_binary_classifier_forward.1']
    #allocation5 [shape = 's32[1]{0}', space=sflag, size = 0x4, scoped, tag = 'scoped memory for inception_v3_binary_classifier_forward.1']
    #allocation6 [shape = 'u8[65536]{0}', space=vmem, size = 0x10000, scoped, tag = 'input window, operand 1, single buffered']
    #allocation7 [shape = 's32[1]{0}', space=sflag, size = 0x4, scoped, tag = 'scoped memory for inception_v3_binary_classifier_forward.1']
    #allocation8 [shape = 'u8[262144]{0}', space=vmem, size = 0x40000, scoped, tag = 'input window, operand 3, single buffered']
    #allocation9 [shape = 'u8[512]{0}', space=vmem, size = 0x400, scoped, tag = 'output window, operand 0, single buffered']
    %13 = vsyncpa [#allocation4], 0
    %14 = vsyncpa [#allocation7], 0
    %15 = vsyncpa [#allocation5], 0
    // Predicated region
    $region2: #{inception_v3_binary_classifier_forward.1} parent=1 // pred_check
      _
    $region3: #{inception_v3_binary_classifier_forward.1} parent=1 // pred_check_branch
      %17 = sbr.rel (0) target = $region5
    $region4: #{inception_v3_binary_classifier_forward.1} parent=1 // pred_region
      %s19 = ssub.s32 64, 64
      %20 = vsyncadd [#allocation4], %s19
      %s22 = sshll.u32 [#allocation3], 4
      %s23 = int_to_ptr.vmem [resolvable:$true] %s22
      %25 = dma.hbm_to_vmem [thread:$0]  %s0, 64, %s23, [#allocation4]
    $region5: #{inception_v3_binary_classifier_forward.1} parent=1 // pred_fallthru
      _
    // Predicated region
    $region6: #{inception_v3_binary_classifier_forward.1} parent=1 // pred_check
      _
    $region7: #{inception_v3_binary_classifier_forward.1} parent=1 // pred_check_branch
      %27 = sbr.rel (0) target = $region9
    $region8: #{inception_v3_binary_classifier_forward.1} parent=1 // pred_region
      %s29 = ssub.s32 2048, 2048
      %30 = vsyncadd [#allocation7], %s29
      %s31 = sshll.u32 [#allocation6], 4
      %s32 = int_to_ptr.vmem [resolvable:$true] %s31
      %37 = dma.hbm_to_vmem [thread:$0]  %s1, 2048, %s32, [#allocation7], 256, 256, 16
    $region9: #{inception_v3_binary_classifier_forward.1} parent=1 // pred_fallthru
      _
    // Predicated region
    $region10: #{inception_v3_binary_classifier_forward.1} parent=1 // pred_check
      _
    $region11: #{inception_v3_binary_classifier_forward.1} parent=1 // pred_check_branch
      %39 = sbr.rel (0) target = $region13
    $region12: #{inception_v3_binary_classifier_forward.1} parent=1 // pred_region
      _
    $region13: #{inception_v3_binary_classifier_forward.1} parent=1 // pred_fallthru
      _
    // Predicated region
    $region14: #{inception_v3_binary_classifier_forward.1} parent=1 // pred_check
      _
    $region15: #{inception_v3_binary_classifier_forward.1} parent=1 // pred_check_branch
      %41 = sbr.rel (0) target = $region17
    $region16: #{inception_v3_binary_classifier_forward.1} parent=1 // pred_region
      %s43 = ssub.s32 8192, 8192
      %44 = vsyncadd [#allocation7], %s43
      %s45 = sshll.u32 [#allocation8], 4
      %s46 = int_to_ptr.vmem [resolvable:$true] %s45
      %51 = dma.hbm_to_vmem [thread:$0]  %s3, 8192, %s46, [#allocation7], 128, 128, 8
    $region17: #{inception_v3_binary_classifier_forward.1} parent=1 // pred_fallthru
      _
    // Predicated region
    $region18: #{inception_v3_binary_classifier_forward.1} parent=1 // pred_check
      _
    $region19: #{inception_v3_binary_classifier_forward.1} parent=1 // pred_check_branch
      %53 = sbr.rel (0) target = $region21
    $region20: #{inception_v3_binary_classifier_forward.1} parent=1 // pred_region
      _
    $region21: #{inception_v3_binary_classifier_forward.1} parent=1 // pred_fallthru
      _
    // Predicated region
    $region22: #{inception_v3_binary_classifier_forward.1} parent=1 // pred_check
      _
    $region23: #{inception_v3_binary_classifier_forward.1} parent=1 // pred_check_branch
      %55 = sbr.rel (0) target = $region25
    $region24: #{inception_v3_binary_classifier_forward.1} parent=1 // pred_region
      _
    $region25: #{inception_v3_binary_classifier_forward.1} parent=1 // pred_fallthru
      _
    // Predicated region
    $region26: #{inception_v3_binary_classifier_forward.1} parent=1 // pred_check
      _
    $region27: #{inception_v3_binary_classifier_forward.1} parent=1 // pred_check_branch
      %57 = sbr.rel (0) target = $region29
    $region28: #{inception_v3_binary_classifier_forward.1} parent=1 // pred_region
      _
    $region29: #{inception_v3_binary_classifier_forward.1} parent=1 // pred_fallthru
      _
    // Predicated region
    $region30: #{inception_v3_binary_classifier_forward.1} parent=1 // pred_check
      _
    $region31: #{inception_v3_binary_classifier_forward.1} parent=1 // pred_check_branch
      %59 = sbr.rel (0) target = $region33
    $region32: #{inception_v3_binary_classifier_forward.1} parent=1 // pred_region
      %60 = dma.done [#allocation4], 64
    $region33: #{inception_v3_binary_classifier_forward.1} parent=1 // pred_fallthru
      _
    // Predicated region
    $region34: #{inception_v3_binary_classifier_forward.1} parent=1 // pred_check
      _
    $region35: #{inception_v3_binary_classifier_forward.1} parent=1 // pred_check_branch
      %62 = sbr.rel (0) target = $region37
    $region36: #{inception_v3_binary_classifier_forward.1} parent=1 // pred_region
      %63 = dma.done [#allocation7], 2048
    $region37: #{inception_v3_binary_classifier_forward.1} parent=1 // pred_fallthru
      _
    // Predicated region
    $region38: #{inception_v3_binary_classifier_forward.1} parent=1 // pred_check
      _
    $region39: #{inception_v3_binary_classifier_forward.1} parent=1 // pred_check_branch
      %65 = sbr.rel (0) target = $region41
    $region40: #{inception_v3_binary_classifier_forward.1} parent=1 // pred_region
      %66 = dma.done [#allocation7], 8192
    $region41: #{inception_v3_binary_classifier_forward.1} parent=1 // pred_fallthru
      _
    %v68 = vld [vmem:[#allocation3] sm:$0xf]
    %v69 = vld [vmem:[#allocation6] sm:$0xff]
    %v70 = vld [vmem:[#allocation6 + $0x8] sm:$0xff]
    %v71 = vld [vmem:[#allocation6 + $0x10] sm:$0xff]
    %v72 = vld [vmem:[#allocation6 + $0x18] sm:$0xff]
    %v73 = vld [vmem:[#allocation6 + $0x20] sm:$0xff]
    %v74 = vld [vmem:[#allocation6 + $0x28] sm:$0xff]
    %v75 = vld [vmem:[#allocation6 + $0x30] sm:$0xff]
    %v76 = vld [vmem:[#allocation6 + $0x38] sm:$0xff]
    %v77 = vld [vmem:[#allocation6 + $0x40] sm:$0xff]
    %v78 = vld [vmem:[#allocation6 + $0x48] sm:$0xff]
    %v79 = vld [vmem:[#allocation6 + $0x50] sm:$0xff]
    %v80 = vld [vmem:[#allocation6 + $0x58] sm:$0xff]
    %v81 = vld [vmem:[#allocation6 + $0x60] sm:$0xff]
    %v82 = vld [vmem:[#allocation6 + $0x68] sm:$0xff]
    %v83 = vld [vmem:[#allocation6 + $0x70] sm:$0xff]
    %v84 = vld [vmem:[#allocation6 + $0x78] sm:$0xff]
    %v85 = vld [vmem:[%s2] sm:$0xf]
    %v87 = vlaneseq
    %v88 = vshrl.u32 %v87, 7
    %v89 = vsub.s32 0, %v88
    %v90 = vrot.slane %v85, %v89
    %v91 = vlaneseq
    %v92 = vshrl.u32 %v91, 7
    %v93 = vsub.s32 1, %v92
    %v94 = vrot.slane %v85, %v93
    %v95 = vlaneseq
    %v96 = vshrl.u32 %v95, 7
    %v97 = vsub.s32 2, %v96
    %v98 = vrot.slane %v85, %v97
    %v99 = vlaneseq
    %v100 = vshrl.u32 %v99, 7
    %v101 = vsub.s32 3, %v100
    %v102 = vrot.slane %v85, %v101
    %v123 = vunpack.c.l.b16 %v69
    %v124 = vunpack.c.h.b16 %v69
    %v125 = vunpack.c.l.b16 %v70
    %v126 = vunpack.c.h.b16 %v70
    %v127 = vunpack.c.l.b16 %v71
    %v128 = vunpack.c.h.b16 %v71
    %v129 = vunpack.c.l.b16 %v72
    %v130 = vunpack.c.h.b16 %v72
    %v131 = vunpack.c.l.b16 %v73
    %v132 = vunpack.c.h.b16 %v73
    %v133 = vunpack.c.l.b16 %v74
    %v134 = vunpack.c.h.b16 %v74
    %v135 = vunpack.c.l.b16 %v75
    %v136 = vunpack.c.h.b16 %v75
    %v137 = vunpack.c.l.b16 %v76
    %v138 = vunpack.c.h.b16 %v76
    %v139 = vunpack.c.l.b16 %v77
    %v140 = vunpack.c.h.b16 %v77
    %v141 = vunpack.c.l.b16 %v78
    %v142 = vunpack.c.h.b16 %v78
    %v143 = vunpack.c.l.b16 %v79
    %v144 = vunpack.c.h.b16 %v79
    %v145 = vunpack.c.l.b16 %v80
    %v146 = vunpack.c.h.b16 %v80
    %v147 = vunpack.c.l.b16 %v81
    %v148 = vunpack.c.h.b16 %v81
    %v149 = vunpack.c.l.b16 %v82
    %v150 = vunpack.c.h.b16 %v82
    %v151 = vunpack.c.l.b16 %v83
    %v152 = vunpack.c.h.b16 %v83
    %v153 = vunpack.c.l.b16 %v84
    %v154 = vunpack.c.h.b16 %v84
    %v155 = vpack.c.b16 %v127, %v123
    %v156 = vpack.c.b16 %v128, %v124
    %v157 = vpack.c.b16 %v129, %v125
    %v158 = vpack.c.b16 %v130, %v126
    %v159 = vpack.c.b16 %v135, %v131
    %v160 = vpack.c.b16 %v136, %v132
    %v161 = vpack.c.b16 %v137, %v133
    %v162 = vpack.c.b16 %v138, %v134
    %v163 = vpack.c.b16 %v143, %v139
    %v164 = vpack.c.b16 %v144, %v140
    %v165 = vpack.c.b16 %v145, %v141
    %v166 = vpack.c.b16 %v146, %v142
    %v167 = vpack.c.b16 %v151, %v147
    %v168 = vpack.c.b16 %v152, %v148
    %v169 = vpack.c.b16 %v153, %v149
    %v170 = vpack.c.b16 %v154, %v150
    %vm187 = vcmask 523264
    %v189 = vsel %vm187, %v68, 0
    %191 = vmatprep.subr.bf16.mxu0 0
    %192 = vmatpush1.bf16.msra.mxu0 0
    %193 = vmatprep.subr.bf16.mxu0 0
    %194 = vmatpush1.bf16.msra.mxu0 0
    %195 = vmatprep.subr.bf16.mxu0 0
    %196 = vmatpush1.bf16.msra.mxu0 0
    %197 = vmatprep.subr.bf16.mxu0 0
    %198 = vmatpush1.bf16.msra.mxu0 0
    %199 = vmatprep.subr.bf16.mxu0 %v168
    %200 = vmatpush1.bf16.msra.mxu0 %v167
    %201 = vmatprep.subr.bf16.mxu0 %v164
    %202 = vmatpush1.bf16.msra.mxu0 %v163
    %203 = vmatprep.subr.bf16.mxu0 %v160
    %204 = vmatpush1.bf16.msra.mxu0 %v159
    %205 = vmatprep.subr.bf16.mxu0 %v156
    %206 = vmatpush1.bf16.msra.mxu0 %v155
    %207 = vmatprep.subr.bf16.mxu0 0
    %208 = vmatpush2.bf16.msra.mxu0 0
    %209 = vmatprep.subr.bf16.mxu0 0
    %210 = vmatpush2.bf16.msra.mxu0 0
    %211 = vmatprep.subr.bf16.mxu0 0
    %212 = vmatpush2.bf16.msra.mxu0 0
    %213 = vmatprep.subr.bf16.mxu0 0
    %214 = vmatpush2.bf16.msra.mxu0 0
    %215 = vmatprep.subr.bf16.mxu0 0
    %216 = vmatpush2.bf16.msra.mxu0 0
    %217 = vmatprep.subr.bf16.mxu0 0
    %218 = vmatpush2.bf16.msra.mxu0 0
    %219 = vmatprep.subr.bf16.mxu0 0
    %220 = vmatpush2.bf16.msra.mxu0 0
    %221 = vmatprep.subr.bf16.mxu0 0
    %222 = vmatpush2.bf16.msra.mxu0 0
    %223 = vmatprep.mubr.bf16.mxu0 0
    %224 = vmatmul.mubr.bf16.gmra.mxu0 %v189
    %v225 = vpop.f32.mrf.mxu0
    %v226 = vadd.f32 %v90, %v225
    %v227 = vpop.f32.mrf.mxu0
    %v228 = vadd.f32 %v94, %v227
    %v229 = vpop.f32.mrf.mxu0
    %v230 = vpop.f32.mrf.mxu0
    %231 = vdwg.mxu0
    %232 = vmatprep.subr.bf16.mxu0 0
    %233 = vmatpush1.bf16.msra.mxu0 0
    %234 = vmatprep.subr.bf16.mxu0 0
    %235 = vmatpush1.bf16.msra.mxu0 0
    %236 = vmatprep.subr.bf16.mxu0 0
    %237 = vmatpush1.bf16.msra.mxu0 0
    %238 = vmatprep.subr.bf16.mxu0 0
    %239 = vmatpush1.bf16.msra.mxu0 0
    %240 = vmatprep.subr.bf16.mxu0 %v170
    %241 = vmatpush1.bf16.msra.mxu0 %v169
    %242 = vmatprep.subr.bf16.mxu0 %v166
    %243 = vmatpush1.bf16.msra.mxu0 %v165
    %244 = vmatprep.subr.bf16.mxu0 %v162
    %245 = vmatpush1.bf16.msra.mxu0 %v161
    %246 = vmatprep.subr.bf16.mxu0 %v158
    %247 = vmatpush1.bf16.msra.mxu0 %v157
    %248 = vmatprep.subr.bf16.mxu0 0
    %249 = vmatpush2.bf16.msra.mxu0 0
    %250 = vmatprep.subr.bf16.mxu0 0
    %251 = vmatpush2.bf16.msra.mxu0 0
    %252 = vmatprep.subr.bf16.mxu0 0
    %253 = vmatpush2.bf16.msra.mxu0 0
    %254 = vmatprep.subr.bf16.mxu0 0
    %255 = vmatpush2.bf16.msra.mxu0 0
    %256 = vmatprep.subr.bf16.mxu0 0
    %257 = vmatpush2.bf16.msra.mxu0 0
    %258 = vmatprep.subr.bf16.mxu0 0
    %259 = vmatpush2.bf16.msra.mxu0 0
    %260 = vmatprep.subr.bf16.mxu0 0
    %261 = vmatpush2.bf16.msra.mxu0 0
    %262 = vmatprep.subr.bf16.mxu0 0
    %263 = vmatpush2.bf16.msra.mxu0 0
    %264 = vmatprep.mubr.bf16.mxu0 0
    %265 = vmatmul.mubr.bf16.gmra.mxu0 %v189
    %v266 = vpop.f32.mrf.mxu0
    %v267 = vadd.f32 %v98, %v266
    %v268 = vpop.f32.mrf.mxu0
    %v269 = vadd.f32 %v102, %v268
    %v270 = vpop.f32.mrf.mxu0
    %v271 = vpop.f32.mrf.mxu0
    %272 = vdwg.mxu0
    %v273 = vmax.f32 %v226, 0.0
    %v274 = vmax.f32 %v228, 0.0
    %v275 = vmax.f32 %v267, 0.0
    %v276 = vmax.f32 %v269, 0.0
    %v277 = vpack.c.bf16 %v273, %v273
    %v278 = vpack.c.bf16 %v274, %v274
    %v279 = vpack.c.bf16 %v275, %v275
    %v280 = vpack.c.bf16 %v276, %v276
    %v281 = vld [vmem:[#allocation8] sm:$0xff]
    %v282 = vld [vmem:[#allocation8 + $0x8] sm:$0xff]
    %v283 = vld [vmem:[#allocation8 + $0x10] sm:$0xff]
    %v284 = vld [vmem:[#allocation8 + $0x18] sm:$0xff]
    %v285 = vld [vmem:[#allocation8 + $0x20] sm:$0xff]
    %v286 = vld [vmem:[#allocation8 + $0x28] sm:$0xff]
    %v287 = vld [vmem:[#allocation8 + $0x30] sm:$0xff]
    %v288 = vld [vmem:[#allocation8 + $0x38] sm:$0xff]
    %v289 = vld [vmem:[#allocation8 + $0x40] sm:$0xff]
    %v290 = vld [vmem:[#allocation8 + $0x48] sm:$0xff]
    %v291 = vld [vmem:[#allocation8 + $0x50] sm:$0xff]
    %v292 = vld [vmem:[#allocation8 + $0x58] sm:$0xff]
    %v293 = vld [vmem:[#allocation8 + $0x60] sm:$0xff]
    %v294 = vld [vmem:[#allocation8 + $0x68] sm:$0xff]
    %v295 = vld [vmem:[#allocation8 + $0x70] sm:$0xff]
    %v296 = vld [vmem:[#allocation8 + $0x78] sm:$0xff]
    %v297 = vld [vmem:[#allocation8 + $0x80] sm:$0xff]
    %v298 = vld [vmem:[#allocation8 + $0x88] sm:$0xff]
    %v299 = vld [vmem:[#allocation8 + $0x90] sm:$0xff]
    %v300 = vld [vmem:[#allocation8 + $0x98] sm:$0xff]
    %v301 = vld [vmem:[#allocation8 + $0xa0] sm:$0xff]
    %v302 = vld [vmem:[#allocation8 + $0xa8] sm:$0xff]
    %v303 = vld [vmem:[#allocation8 + $0xb0] sm:$0xff]
    %v304 = vld [vmem:[#allocation8 + $0xb8] sm:$0xff]
    %v305 = vld [vmem:[#allocation8 + $0xc0] sm:$0xff]
    %v306 = vld [vmem:[#allocation8 + $0xc8] sm:$0xff]
    %v307 = vld [vmem:[#allocation8 + $0xd0] sm:$0xff]
    %v308 = vld [vmem:[#allocation8 + $0xd8] sm:$0xff]
    %v309 = vld [vmem:[#allocation8 + $0xe0] sm:$0xff]
    %v310 = vld [vmem:[#allocation8 + $0xe8] sm:$0xff]
    %v311 = vld [vmem:[#allocation8 + $0xf0] sm:$0xff]
    %v312 = vld [vmem:[#allocation8 + $0xf8] sm:$0xff]
    %v313 = vld [vmem:[#allocation8 + $0x100] sm:$0xff]
    %v314 = vld [vmem:[#allocation8 + $0x108] sm:$0xff]
    %v315 = vld [vmem:[#allocation8 + $0x110] sm:$0xff]
    %v316 = vld [vmem:[#allocation8 + $0x118] sm:$0xff]
    %v317 = vld [vmem:[#allocation8 + $0x120] sm:$0xff]
    %v318 = vld [vmem:[#allocation8 + $0x128] sm:$0xff]
    %v319 = vld [vmem:[#allocation8 + $0x130] sm:$0xff]
    %v320 = vld [vmem:[#allocation8 + $0x138] sm:$0xff]
    %v321 = vld [vmem:[#allocation8 + $0x140] sm:$0xff]
    %v322 = vld [vmem:[#allocation8 + $0x148] sm:$0xff]
    %v323 = vld [vmem:[#allocation8 + $0x150] sm:$0xff]
    %v324 = vld [vmem:[#allocation8 + $0x158] sm:$0xff]
    %v325 = vld [vmem:[#allocation8 + $0x160] sm:$0xff]
    %v326 = vld [vmem:[#allocation8 + $0x168] sm:$0xff]
    %v327 = vld [vmem:[#allocation8 + $0x170] sm:$0xff]
    %v328 = vld [vmem:[#allocation8 + $0x178] sm:$0xff]
    %v329 = vld [vmem:[#allocation8 + $0x180] sm:$0xff]
    %v330 = vld [vmem:[#allocation8 + $0x188] sm:$0xff]
    %v331 = vld [vmem:[#allocation8 + $0x190] sm:$0xff]
    %v332 = vld [vmem:[#allocation8 + $0x198] sm:$0xff]
    %v333 = vld [vmem:[#allocation8 + $0x1a0] sm:$0xff]
    %v334 = vld [vmem:[#allocation8 + $0x1a8] sm:$0xff]
    %v335 = vld [vmem:[#allocation8 + $0x1b0] sm:$0xff]
    %v336 = vld [vmem:[#allocation8 + $0x1b8] sm:$0xff]
    %v337 = vld [vmem:[#allocation8 + $0x1c0] sm:$0xff]
    %v338 = vld [vmem:[#allocation8 + $0x1c8] sm:$0xff]
    %v339 = vld [vmem:[#allocation8 + $0x1d0] sm:$0xff]
    %v340 = vld [vmem:[#allocation8 + $0x1d8] sm:$0xff]
    %v341 = vld [vmem:[#allocation8 + $0x1e0] sm:$0xff]
    %v342 = vld [vmem:[#allocation8 + $0x1e8] sm:$0xff]
    %v343 = vld [vmem:[#allocation8 + $0x1f0] sm:$0xff]
    %v344 = vld [vmem:[#allocation8 + $0x1f8] sm:$0xff]
    %v345 = vld [vmem:[%s4] sm:$0x3]
    %v347 = vlaneseq
    %v348 = vshrl.u32 %v347, 7
    %v349 = vsub.s32 0, %v348
    %v350 = vrot.slane %v345, %v349
    %v351 = vlaneseq
    %v352 = vshrl.u32 %v351, 7
    %v353 = vsub.s32 1, %v352
    %v354 = vrot.slane %v345, %v353
    %v421 = vunpack.c.l.b16 %v281
    %v422 = vunpack.c.h.b16 %v281
    %v423 = vunpack.c.l.b16 %v282
    %v424 = vunpack.c.h.b16 %v282
    %v425 = vunpack.c.l.b16 %v283
    %v426 = vunpack.c.h.b16 %v283
    %v427 = vunpack.c.l.b16 %v284
    %v428 = vunpack.c.h.b16 %v284
    %v429 = vunpack.c.l.b16 %v285
    %v430 = vunpack.c.h.b16 %v285
    %v431 = vunpack.c.l.b16 %v286
    %v432 = vunpack.c.h.b16 %v286
    %v433 = vunpack.c.l.b16 %v287
    %v434 = vunpack.c.h.b16 %v287
    %v435 = vunpack.c.l.b16 %v288
    %v436 = vunpack.c.h.b16 %v288
    %v437 = vunpack.c.l.b16 %v289
    %v438 = vunpack.c.h.b16 %v289
    %v439 = vunpack.c.l.b16 %v290
    %v440 = vunpack.c.h.b16 %v290
    %v441 = vunpack.c.l.b16 %v291
    %v442 = vunpack.c.h.b16 %v291
    %v443 = vunpack.c.l.b16 %v292
    %v444 = vunpack.c.h.b16 %v292
    %v445 = vunpack.c.l.b16 %v293
    %v446 = vunpack.c.h.b16 %v293
    %v447 = vunpack.c.l.b16 %v294
    %v448 = vunpack.c.h.b16 %v294
    %v449 = vunpack.c.l.b16 %v295
    %v450 = vunpack.c.h.b16 %v295
    %v451 = vunpack.c.l.b16 %v296
    %v452 = vunpack.c.h.b16 %v296
    %v453 = vunpack.c.l.b16 %v297
    %v454 = vunpack.c.h.b16 %v297
    %v455 = vunpack.c.l.b16 %v298
    %v456 = vunpack.c.h.b16 %v298
    %v457 = vunpack.c.l.b16 %v299
    %v458 = vunpack.c.h.b16 %v299
    %v459 = vunpack.c.l.b16 %v300
    %v460 = vunpack.c.h.b16 %v300
    %v461 = vunpack.c.l.b16 %v301
    %v462 = vunpack.c.h.b16 %v301
    %v463 = vunpack.c.l.b16 %v302
    %v464 = vunpack.c.h.b16 %v302
    %v465 = vunpack.c.l.b16 %v303
    %v466 = vunpack.c.h.b16 %v303
    %v467 = vunpack.c.l.b16 %v304
    %v468 = vunpack.c.h.b16 %v304
    %v469 = vunpack.c.l.b16 %v305
    %v470 = vunpack.c.h.b16 %v305
    %v471 = vunpack.c.l.b16 %v306
    %v472 = vunpack.c.h.b16 %v306
    %v473 = vunpack.c.l.b16 %v307
    %v474 = vunpack.c.h.b16 %v307
    %v475 = vunpack.c.l.b16 %v308
    %v476 = vunpack.c.h.b16 %v308
    %v477 = vunpack.c.l.b16 %v309
    %v478 = vunpack.c.h.b16 %v309
    %v479 = vunpack.c.l.b16 %v310
    %v480 = vunpack.c.h.b16 %v310
    %v481 = vunpack.c.l.b16 %v311
    %v482 = vunpack.c.h.b16 %v311
    %v483 = vunpack.c.l.b16 %v312
    %v484 = vunpack.c.h.b16 %v312
    %v485 = vunpack.c.l.b16 %v313
    %v486 = vunpack.c.h.b16 %v313
    %v487 = vunpack.c.l.b16 %v314
    %v488 = vunpack.c.h.b16 %v314
    %v489 = vunpack.c.l.b16 %v315
    %v490 = vunpack.c.h.b16 %v315
    %v491 = vunpack.c.l.b16 %v316
    %v492 = vunpack.c.h.b16 %v316
    %v493 = vunpack.c.l.b16 %v317
    %v494 = vunpack.c.h.b16 %v317
    %v495 = vunpack.c.l.b16 %v318
    %v496 = vunpack.c.h.b16 %v318
    %v497 = vunpack.c.l.b16 %v319
    %v498 = vunpack.c.h.b16 %v319
    %v499 = vunpack.c.l.b16 %v320
    %v500 = vunpack.c.h.b16 %v320
    %v501 = vunpack.c.l.b16 %v321
    %v502 = vunpack.c.h.b16 %v321
    %v503 = vunpack.c.l.b16 %v322
    %v504 = vunpack.c.h.b16 %v322
    %v505 = vunpack.c.l.b16 %v323
    %v506 = vunpack.c.h.b16 %v323
    %v507 = vunpack.c.l.b16 %v324
    %v508 = vunpack.c.h.b16 %v324
    %v509 = vunpack.c.l.b16 %v325
    %v510 = vunpack.c.h.b16 %v325
    %v511 = vunpack.c.l.b16 %v326
    %v512 = vunpack.c.h.b16 %v326
    %v513 = vunpack.c.l.b16 %v327
    %v514 = vunpack.c.h.b16 %v327
    %v515 = vunpack.c.l.b16 %v328
    %v516 = vunpack.c.h.b16 %v328
    %v517 = vunpack.c.l.b16 %v329
    %v518 = vunpack.c.h.b16 %v329
    %v519 = vunpack.c.l.b16 %v330
    %v520 = vunpack.c.h.b16 %v330
    %v521 = vunpack.c.l.b16 %v331
    %v522 = vunpack.c.h.b16 %v331
    %v523 = vunpack.c.l.b16 %v332
    %v524 = vunpack.c.h.b16 %v332
    %v525 = vunpack.c.l.b16 %v333
    %v526 = vunpack.c.h.b16 %v333
    %v527 = vunpack.c.l.b16 %v334
    %v528 = vunpack.c.h.b16 %v334
    %v529 = vunpack.c.l.b16 %v335
    %v530 = vunpack.c.h.b16 %v335
    %v531 = vunpack.c.l.b16 %v336
    %v532 = vunpack.c.h.b16 %v336
    %v533 = vunpack.c.l.b16 %v337
    %v534 = vunpack.c.h.b16 %v337
    %v535 = vunpack.c.l.b16 %v338
    %v536 = vunpack.c.h.b16 %v338
    %v537 = vunpack.c.l.b16 %v339
    %v538 = vunpack.c.h.b16 %v339
    %v539 = vunpack.c.l.b16 %v340
    %v540 = vunpack.c.h.b16 %v340
    %v541 = vunpack.c.l.b16 %v341
    %v542 = vunpack.c.h.b16 %v341
    %v543 = vunpack.c.l.b16 %v342
    %v544 = vunpack.c.h.b16 %v342
    %v545 = vunpack.c.l.b16 %v343
    %v546 = vunpack.c.h.b16 %v343
    %v547 = vunpack.c.l.b16 %v344
    %v548 = vunpack.c.h.b16 %v344
    %v549 = vpack.c.b16 %v423, %v421
    %v550 = vpack.c.b16 %v424, %v422
    %v551 = vpack.c.b16 %v427, %v425
    %v552 = vpack.c.b16 %v428, %v426
    %v553 = vpack.c.b16 %v431, %v429
    %v554 = vpack.c.b16 %v432, %v430
    %v555 = vpack.c.b16 %v435, %v433
    %v556 = vpack.c.b16 %v436, %v434
    %v557 = vpack.c.b16 %v439, %v437
    %v558 = vpack.c.b16 %v440, %v438
    %v559 = vpack.c.b16 %v443, %v441
    %v560 = vpack.c.b16 %v444, %v442
    %v561 = vpack.c.b16 %v447, %v445
    %v562 = vpack.c.b16 %v448, %v446
    %v563 = vpack.c.b16 %v451, %v449
    %v564 = vpack.c.b16 %v452, %v450
    %v565 = vpack.c.b16 %v455, %v453
    %v566 = vpack.c.b16 %v456, %v454
    %v567 = vpack.c.b16 %v459, %v457
    %v568 = vpack.c.b16 %v460, %v458
    %v569 = vpack.c.b16 %v463, %v461
    %v570 = vpack.c.b16 %v464, %v462
    %v571 = vpack.c.b16 %v467, %v465
    %v572 = vpack.c.b16 %v468, %v466
    %v573 = vpack.c.b16 %v471, %v469
    %v574 = vpack.c.b16 %v472, %v470
    %v575 = vpack.c.b16 %v475, %v473
    %v576 = vpack.c.b16 %v476, %v474
    %v577 = vpack.c.b16 %v479, %v477
    %v578 = vpack.c.b16 %v480, %v478
    %v579 = vpack.c.b16 %v483, %v481
    %v580 = vpack.c.b16 %v484, %v482
    %v581 = vpack.c.b16 %v487, %v485
    %v582 = vpack.c.b16 %v488, %v486
    %v583 = vpack.c.b16 %v491, %v489
    %v584 = vpack.c.b16 %v492, %v490
    %v585 = vpack.c.b16 %v495, %v493
    %v586 = vpack.c.b16 %v496, %v494
    %v587 = vpack.c.b16 %v499, %v497
    %v588 = vpack.c.b16 %v500, %v498
    %v589 = vpack.c.b16 %v503, %v501
    %v590 = vpack.c.b16 %v504, %v502
    %v591 = vpack.c.b16 %v507, %v505
    %v592 = vpack.c.b16 %v508, %v506
    %v593 = vpack.c.b16 %v511, %v509
    %v594 = vpack.c.b16 %v512, %v510
    %v595 = vpack.c.b16 %v515, %v513
    %v596 = vpack.c.b16 %v516, %v514
    %v597 = vpack.c.b16 %v519, %v517
    %v598 = vpack.c.b16 %v520, %v518
    %v599 = vpack.c.b16 %v523, %v521
    %v600 = vpack.c.b16 %v524, %v522
    %v601 = vpack.c.b16 %v527, %v525
    %v602 = vpack.c.b16 %v528, %v526
    %v603 = vpack.c.b16 %v531, %v529
    %v604 = vpack.c.b16 %v532, %v530
    %v605 = vpack.c.b16 %v535, %v533
    %v606 = vpack.c.b16 %v536, %v534
    %v607 = vpack.c.b16 %v539, %v537
    %v608 = vpack.c.b16 %v540, %v538
    %v609 = vpack.c.b16 %v543, %v541
    %v610 = vpack.c.b16 %v544, %v542
    %v611 = vpack.c.b16 %v547, %v545
    %v612 = vpack.c.b16 %v548, %v546
    %677 = vmatprep.subr.bf16.mxu0 %v564
    %678 = vmatpush1.bf16.msra.mxu0 %v563
    %679 = vmatprep.subr.bf16.mxu0 %v562
    %680 = vmatpush1.bf16.msra.mxu0 %v561
    %681 = vmatprep.subr.bf16.mxu0 %v560
    %682 = vmatpush1.bf16.msra.mxu0 %v559
    %683 = vmatprep.subr.bf16.mxu0 %v558
    %684 = vmatpush1.bf16.msra.mxu0 %v557
    %685 = vmatprep.subr.bf16.mxu0 %v556
    %686 = vmatpush1.bf16.msra.mxu0 %v555
    %687 = vmatprep.subr.bf16.mxu0 %v554
    %688 = vmatpush1.bf16.msra.mxu0 %v553
    %689 = vmatprep.subr.bf16.mxu0 %v552
    %690 = vmatpush1.bf16.msra.mxu0 %v551
    %691 = vmatprep.subr.bf16.mxu0 %v550
    %692 = vmatpush1.bf16.msra.mxu0 %v549
    %693 = vmatprep.subr.bf16.mxu0 %v580
    %694 = vmatpush2.bf16.msra.mxu0 %v579
    %695 = vmatprep.subr.bf16.mxu0 %v578
    %696 = vmatpush2.bf16.msra.mxu0 %v577
    %697 = vmatprep.subr.bf16.mxu0 %v576
    %698 = vmatpush2.bf16.msra.mxu0 %v575
    %699 = vmatprep.subr.bf16.mxu0 %v574
    %700 = vmatpush2.bf16.msra.mxu0 %v573
    %701 = vmatprep.subr.bf16.mxu0 %v572
    %702 = vmatpush2.bf16.msra.mxu0 %v571
    %703 = vmatprep.subr.bf16.mxu0 %v570
    %704 = vmatpush2.bf16.msra.mxu0 %v569
    %705 = vmatprep.subr.bf16.mxu0 %v568
    %706 = vmatpush2.bf16.msra.mxu0 %v567
    %707 = vmatprep.subr.bf16.mxu0 %v566
    %708 = vmatpush2.bf16.msra.mxu0 %v565
    %709 = vmatprep.mubr.bf16.mxu0 %v278
    %710 = vmatmul.mubr.bf16.gmra.mxu0 %v277
    %v711 = vpop.f32.mrf.mxu0
    %v712 = vadd.f32 %v350, %v711
    %v713 = vpop.f32.mrf.mxu0
    %v714 = vadd.f32 %v354, %v713
    %v715 = vpop.f32.mrf.mxu0
    %v716 = vpop.f32.mrf.mxu0
    %717 = vdwg.mxu0
    %718 = vmatprep.subr.bf16.mxu0 %v596
    %719 = vmatpush1.bf16.msra.mxu0 %v595
    %720 = vmatprep.subr.bf16.mxu0 %v594
    %721 = vmatpush1.bf16.msra.mxu0 %v593
    %722 = vmatprep.subr.bf16.mxu0 %v592
    %723 = vmatpush1.bf16.msra.mxu0 %v591
    %724 = vmatprep.subr.bf16.mxu0 %v590
    %725 = vmatpush1.bf16.msra.mxu0 %v589
    %726 = vmatprep.subr.bf16.mxu0 %v588
    %727 = vmatpush1.bf16.msra.mxu0 %v587
    %728 = vmatprep.subr.bf16.mxu0 %v586
    %729 = vmatpush1.bf16.msra.mxu0 %v585
    %730 = vmatprep.subr.bf16.mxu0 %v584
    %731 = vmatpush1.bf16.msra.mxu0 %v583
    %732 = vmatprep.subr.bf16.mxu0 %v582
    %733 = vmatpush1.bf16.msra.mxu0 %v581
    %734 = vmatprep.subr.bf16.mxu0 %v612
    %735 = vmatpush2.bf16.msra.mxu0 %v611
    %736 = vmatprep.subr.bf16.mxu0 %v610
    %737 = vmatpush2.bf16.msra.mxu0 %v609
    %738 = vmatprep.subr.bf16.mxu0 %v608
    %739 = vmatpush2.bf16.msra.mxu0 %v607
    %740 = vmatprep.subr.bf16.mxu0 %v606
    %741 = vmatpush2.bf16.msra.mxu0 %v605
    %742 = vmatprep.subr.bf16.mxu0 %v604
    %743 = vmatpush2.bf16.msra.mxu0 %v603
    %744 = vmatprep.subr.bf16.mxu0 %v602
    %745 = vmatpush2.bf16.msra.mxu0 %v601
    %746 = vmatprep.subr.bf16.mxu0 %v600
    %747 = vmatpush2.bf16.msra.mxu0 %v599
    %748 = vmatprep.subr.bf16.mxu0 %v598
    %749 = vmatpush2.bf16.msra.mxu0 %v597
    %750 = vmatprep.mubr.bf16.mxu0 %v280
    %751 = vmatmul.mubr.bf16.gmra.mxu0 %v279
    %v752 = vpop.f32.mrf.mxu0
    %v753 = vadd.f32 %v712, %v752
    %v754 = vpop.f32.mrf.mxu0
    %v755 = vadd.f32 %v714, %v754
    %v756 = vpop.f32.mrf.mxu0
    %v757 = vpop.f32.mrf.mxu0
    %758 = vdwg.mxu0
    %v759 = vmax.f32 %v753, 0.0
    %v760 = vmax.f32 %v755, 0.0
    %761 = vxpose.xlu0.b32.start [1/16] %v759, 128
    %762 = vxpose.xlu0.b32.cont [2/16] 0.0, 128
    %763 = vxpose.xlu0.b32.cont [3/16] 0.0, 128
    %764 = vxpose.xlu0.b32.cont [4/16] 0.0, 128
    %765 = vxpose.xlu0.b32.cont [5/16] 0.0, 128
    %766 = vxpose.xlu0.b32.cont [6/16] 0.0, 128
    %767 = vxpose.xlu0.b32.cont [7/16] 0.0, 128
    %768 = vxpose.xlu0.b32.cont [8/16] 0.0, 128
    %769 = vxpose.xlu0.b32.cont [9/16] 0.0, 128
    %770 = vxpose.xlu0.b32.cont [10/16] 0.0, 128
    %771 = vxpose.xlu0.b32.cont [11/16] 0.0, 128
    %772 = vxpose.xlu0.b32.cont [12/16] 0.0, 128
    %773 = vxpose.xlu0.b32.cont [13/16] 0.0, 128
    %774 = vxpose.xlu0.b32.cont [14/16] 0.0, 128
    %775 = vxpose.xlu0.b32.cont [15/16] 0.0, 128
    %776 = vxpose.xlu0.b32.end [16/16] 0.0, 128
    %v777 = vpop.trf.xlu0
    %v778 = vpop.trf.xlu0
    %v779 = vpop.trf.xlu0
    %v780 = vpop.trf.xlu0
    %v781 = vpop.trf.xlu0
    %v782 = vpop.trf.xlu0
    %v783 = vpop.trf.xlu0
    %v784 = vpop.trf.xlu0
    %v785 = vpop.trf.xlu0
    %v786 = vpop.trf.xlu0
    %v787 = vpop.trf.xlu0
    %v788 = vpop.trf.xlu0
    %v789 = vpop.trf.xlu0
    %v790 = vpop.trf.xlu0
    %v791 = vpop.trf.xlu0
    %v792 = vpop.trf.xlu0
    %793 = vxpose.xlu0.b32.start [1/16] %v760, 128
    %794 = vxpose.xlu0.b32.cont [2/16] 0.0, 128
    %795 = vxpose.xlu0.b32.cont [3/16] 0.0, 128
    %796 = vxpose.xlu0.b32.cont [4/16] 0.0, 128
    %797 = vxpose.xlu0.b32.cont [5/16] 0.0, 128
    %798 = vxpose.xlu0.b32.cont [6/16] 0.0, 128
    %799 = vxpose.xlu0.b32.cont [7/16] 0.0, 128
    %800 = vxpose.xlu0.b32.cont [8/16] 0.0, 128
    %801 = vxpose.xlu0.b32.cont [9/16] 0.0, 128
    %802 = vxpose.xlu0.b32.cont [10/16] 0.0, 128
    %803 = vxpose.xlu0.b32.cont [11/16] 0.0, 128
    %804 = vxpose.xlu0.b32.cont [12/16] 0.0, 128
    %805 = vxpose.xlu0.b32.cont [13/16] 0.0, 128
    %806 = vxpose.xlu0.b32.cont [14/16] 0.0, 128
    %807 = vxpose.xlu0.b32.cont [15/16] 0.0, 128
    %808 = vxpose.xlu0.b32.end [16/16] 0.0, 128
    %v809 = vpop.trf.xlu0
    %v810 = vpop.trf.xlu0
    %v811 = vpop.trf.xlu0
    %v812 = vpop.trf.xlu0
    %v813 = vpop.trf.xlu0
    %v814 = vpop.trf.xlu0
    %v815 = vpop.trf.xlu0
    %v816 = vpop.trf.xlu0
    %v817 = vpop.trf.xlu0
    %v818 = vpop.trf.xlu0
    %v819 = vpop.trf.xlu0
    %v820 = vpop.trf.xlu0
    %v821 = vpop.trf.xlu0
    %v822 = vpop.trf.xlu0
    %v823 = vpop.trf.xlu0
    %v824 = vpop.trf.xlu0
    %v825 = vpack.c.bf16 %v778, %v777
    %v826 = vpack.c.bf16 %v780, %v779
    %v827 = vpack.c.bf16 %v782, %v781
    %v828 = vpack.c.bf16 %v784, %v783
    %v829 = vpack.c.bf16 %v786, %v785
    %v830 = vpack.c.bf16 %v788, %v787
    %v831 = vpack.c.bf16 %v790, %v789
    %v832 = vpack.c.bf16 %v792, %v791
    %v833 = vpack.c.bf16 %v810, %v809
    %v834 = vpack.c.bf16 %v812, %v811
    %v835 = vpack.c.bf16 %v814, %v813
    %v836 = vpack.c.bf16 %v816, %v815
    %v837 = vpack.c.bf16 %v818, %v817
    %v838 = vpack.c.bf16 %v820, %v819
    %v839 = vpack.c.bf16 %v822, %v821
    %v840 = vpack.c.bf16 %v824, %v823
    %v841 = vld [vmem:[%s5] sm:$0x3]
    %s842 = sld [smem:[#allocation2]]
    %v843 = vstv %s842
    %v846 = vunpack.c.l.s4 1966171168
    %v847 = vunpack.c.0.s8 %v846
    %v848 = vlaneseq
    %v849 = vshrl.u32 %v848, 7
    %v850 = vsub.s32 %v847, %v849
    %v851 = vrot.slane %v841, %v850
    %v852 = vcombine.high %v851, %v851
    %v854 = vunpack.c.l.s4 1966171168
    %v855 = vunpack.c.0.s8 %v854
    %v856 = vlaneseq
    %v857 = vshrl.u32 %v856, 7
    %v858 = vsub.s32 %v855, %v857
    %v859 = vrot.slane %v851, %v858
    %v861 = vunpack.c.l.s4 1966171168
    %v862 = vunpack.c.0.s8 %v861
    %v863 = vlaneseq
    %v864 = vshrl.u32 %v863, 7
    %v865 = vsub.s32 %v862, %v864
    %v866 = vrot.slane %v852, %v865
    %869 = vmatprep.subr.bf16.mxu0 0
    %870 = vmatpush1.bf16.msra.mxu0 %v832
    %871 = vmatprep.subr.bf16.mxu0 0
    %872 = vmatpush1.bf16.msra.mxu0 %v831
    %873 = vmatprep.subr.bf16.mxu0 0
    %874 = vmatpush1.bf16.msra.mxu0 %v830
    %875 = vmatprep.subr.bf16.mxu0 0
    %876 = vmatpush1.bf16.msra.mxu0 %v829
    %877 = vmatprep.subr.bf16.mxu0 0
    %878 = vmatpush1.bf16.msra.mxu0 %v828
    %879 = vmatprep.subr.bf16.mxu0 0
    %880 = vmatpush1.bf16.msra.mxu0 %v827
    %881 = vmatprep.subr.bf16.mxu0 0
    %882 = vmatpush1.bf16.msra.mxu0 %v826
    %883 = vmatprep.subr.bf16.mxu0 0
    %884 = vmatpush1.bf16.msra.mxu0 %v825
    %885 = vmatprep.subr.bf16.mxu0 0
    %886 = vmatpush2.bf16.msra.mxu0 %v840
    %887 = vmatprep.subr.bf16.mxu0 0
    %888 = vmatpush2.bf16.msra.mxu0 %v839
    %889 = vmatprep.subr.bf16.mxu0 0
    %890 = vmatpush2.bf16.msra.mxu0 %v838
    %891 = vmatprep.subr.bf16.mxu0 0
    %892 = vmatpush2.bf16.msra.mxu0 %v837
    %893 = vmatprep.subr.bf16.mxu0 0
    %894 = vmatpush2.bf16.msra.mxu0 %v836
    %895 = vmatprep.subr.bf16.mxu0 0
    %896 = vmatpush2.bf16.msra.mxu0 %v835
    %897 = vmatprep.subr.bf16.mxu0 0
    %898 = vmatpush2.bf16.msra.mxu0 %v834
    %899 = vmatprep.subr.bf16.mxu0 0
    %900 = vmatpush2.bf16.msra.mxu0 %v833
    %901 = vmatprep.mubr.bf16.mxu0 %v866
    %902 = vmatmul.mubr.bf16.gmra.mxu0 %v859
    %v903 = vpop.f32.mrf.mxu0
    %v904 = vadd.f32 %v843, %v903
    %v905 = vpop.f32.mrf.mxu0
    %v906 = vpop.f32.mrf.mxu0
    %v907 = vpop.f32.mrf.mxu0
    %908 = vdwg.mxu0
    %v909 = vsub.f32 0.0, %v904
    %v910 = vmul.f32 %v909, 1.442695
    %v911 = vpow.pop %v910
    %v912 = vadd.f32 %v911, 1.0
    %v913 = vrcp.pop %v912
    %vm914 = vcmask 57344
    %915 = vst.msk [vmem:[#allocation9] sm:$0x1] %vm914, %v913
    // Predicated region
    $region42: #{inception_v3_binary_classifier_forward.1} parent=1 // pred_check
      _
    $region43: #{inception_v3_binary_classifier_forward.1} parent=1 // pred_check_branch
      %917 = sbr.rel (0) target = $region45
    $region44: #{inception_v3_binary_classifier_forward.1} parent=1 // pred_region
      %s919 = ssub.s32 16, 16
      %920 = vsyncadd [#allocation5], %s919
      %s922 = sshll.u32 [#allocation9], 4
      %s923 = int_to_ptr.vmem [resolvable:$true] %s922
      %925 = dma.vmem_to_hbm [thread:$0]  %s923, 16, %s7, [#allocation5]
    $region45: #{inception_v3_binary_classifier_forward.1} parent=1 // pred_fallthru
      _
    // Predicated region
    $region46: #{inception_v3_binary_classifier_forward.1} parent=1 // pred_check
      _
    $region47: #{inception_v3_binary_classifier_forward.1} parent=1 // pred_check_branch
      %927 = sbr.rel (0) target = $region49
    $region48: #{inception_v3_binary_classifier_forward.1} parent=1 // pred_region
      %928 = dma.done [#allocation5], 16
    $region49: #{inception_v3_binary_classifier_forward.1} parent=1 // pred_fallthru
      _
    %929 = vsyncpa [#allocation4], 1
    %930 = vsyncpa [#allocation7], 1
    %931 = vsyncpa [#allocation5], 1

</llo_original>
